<compile_context>
chip_gen: v5e
topology: v5e:2x2
jax: 0.10.0
libtpu: 0.0.40
codegen_flags: <defaults>
</compile_context>

<pallas_src>
import functools

import jax
import jax.numpy as jnp
from jax.experimental import pallas as pl
from jax.experimental.pallas import tpu as pltpu


def _round_up(x, m):
    return ((x + m - 1) // m) * m


def _round_down(x, m):
    return (x // m) * m


def _hydraulics_loss_kernel(imb_ref, mask_ref, part_ref, acc_ref, *,
                            l_total, tl, need_row_mask):
    # imb_ref : VMEM [tl, tn]     imbalance block, native dtype (f32/bf16)
    # mask_ref: VMEM [1, tn]      f32, 1.0 where psrc == 0, 0.0 elsewhere/pad
    # part_ref: VMEM [1, 8, 128]  f32 per-L-tile partial sum (resident over j)
    # acc_ref : VMEM [1, tn]      f32 lane accumulator (scratch)
    i = pl.program_id(0)
    j = pl.program_id(1)

    @pl.when(j == 0)
    def _():
        acc_ref[...] = jnp.zeros_like(acc_ref)

    imb = imb_ref[...].astype(jnp.float32)          # upcast inside the kernel
    sq = imb * imb                                  # VPU
    keep = mask_ref[...] != 0.0                     # [1, tn], broadcasts over rows
    if need_row_mask:
        # L is not a multiple of tl: exclude out-of-bounds garbage rows of the
        # boundary L block (static flag -> zero cost when L divides tl).
        row = i * tl + jax.lax.broadcasted_iota(jnp.int32, (tl, 1), 0)
        keep = jnp.logical_and(keep, row < l_total)
    # select (not multiply) so non-finite garbage at masked-out positions is excluded
    contrib = jnp.where(keep, sq, jnp.float32(0.0))
    # sublane reduce (XLU) into a tiny resident accumulator
    acc_ref[...] += jnp.sum(contrib, axis=0, keepdims=True)

    @pl.when(j == pl.num_programs(1) - 1)
    def _():
        # one cross-lane reduce per L tile, out of the hot loop
        s = jnp.sum(acc_ref[...])
        part_ref[...] = jnp.broadcast_to(s, part_ref.shape)


def hydraulics_loss(x, P, imbalance):
    """JAX/Pallas equivalent of HydraulicsLoss.forward.

    Args:
      x:         [N, F] node features (last feature is psrc).
      P:         pressures (unused by the loss, kept for signature parity).
      imbalance: [L, N, 1] imbalances (f32 or bf16).

    Returns:
      scalar float32 loss. (NaN if no node has psrc == 0, matching torch
      .mean() over an empty selection.)
    """
    del P  # not used in the reference forward
    L, N, _ = imbalance.shape
    imb2d = imbalance.reshape(L, N)                 # native dtype, NOT padded

    psrc = x[..., -1]
    mask_bool = psrc == 0
    count = jnp.sum(mask_bool).astype(jnp.float32)  # computed outside the kernel

    # --- tiling: lane-dense (8,128)-aligned blocks, sized by bytes (~2 MiB) ---
    itemsize = jnp.dtype(imb2d.dtype).itemsize
    l_ceil = _round_up(L, 8)
    n_ceil = _round_up(N, 128)
    target_bytes = 2 * 1024 * 1024                  # per input block
    tn = min(n_ceil, 4096)
    tl = min(l_ceil, max(8, _round_down(target_bytes // (tn * itemsize), 8)))
    if tl == l_ceil:
        # L is the small side: spend the leftover byte budget on more lanes so
        # small-L shapes don't collapse to tiny blocks (per-step overhead).
        tn = min(n_ceil, max(tn, _round_down(target_bytes // (tl * itemsize), 128)))

    grid_l = (L + tl - 1) // tl
    grid_n = (N + tn - 1) // tn

    # The mask is tiny, so padding it (with zeros) is free; it excludes the
    # garbage columns of the boundary N block. imbalance itself is not padded.
    mask = jnp.zeros((1, grid_n * tn), jnp.float32)
    mask = mask.at[0, :N].set(mask_bool.astype(jnp.float32))

    kernel = functools.partial(
        _hydraulics_loss_kernel,
        l_total=L, tl=tl, need_row_mask=(L % tl) != 0)

    # double-buffered input blocks + mask + acc scratch + output block, 2x headroom;
    # capped at 32 MiB so double-buffering stays intact on v7x (64 MiB physical).
    vmem_needed = (2 * tl * tn * itemsize          # double-buffered imbalance block
                   + 2 * 8 * tn * 4                # double-buffered mask row (sublane-padded)
                   + 8 * tn * 4                    # acc scratch (sublane-padded)
                   + 2 * 8 * 128 * 4)              # output block
    vmem_limit = int(min(32 * 1024 * 1024, max(4 * 1024 * 1024, 2 * vmem_needed)))

    partials = pl.pallas_call(
        kernel,
        out_shape=jax.ShapeDtypeStruct((grid_l, 8, 128), jnp.float32),
        grid=(grid_l, grid_n),
        in_specs=[
            pl.BlockSpec((tl, tn), lambda i, j: (i, j)),
            pl.BlockSpec((1, tn), lambda i, j: (0, j)),
        ],
        out_specs=pl.BlockSpec((1, 8, 128), lambda i, j: (i, 0, 0)),
        scratch_shapes=[pltpu.VMEM((1, tn), jnp.float32)],
        compiler_params=pltpu.CompilerParams(
            # L axis carries independent per-tile partial sums -> shardable
            # across v7x's 2 TensorCores; N axis is the reduction (inner) axis.
            dimension_semantics=("parallel", "arbitrary"),
            vmem_limit_bytes=vmem_limit,
        ),
    )(imb2d, mask)

    masked_sum = jnp.sum(partials[:, 0, 0])
    # NaN when no node has psrc == 0, matching torch's mean over an empty selection.
    return masked_sum / (jnp.float32(L) * count)


if __name__ == "__main__":
    key = jax.random.PRNGKey(0)
    kx, kp, ki = jax.random.split(key, 3)

    N, F, L = 16, 4, 3  # nodes, node-features, layers

    # Node features: last column is psrc; every 3rd node is a non-source (psrc == 0).
    x = jax.random.normal(kx, (N, F), dtype=jnp.float32)
    psrc = jnp.where(jnp.arange(N) % 3 == 0, 0.0, 1.0).astype(jnp.float32)
    x = x.at[:, -1].set(psrc)

    P = jax.random.normal(kp, (L, N, 1), dtype=jnp.float32)          # unused
    imbalance = jax.random.normal(ki, (L, N, 1), dtype=jnp.float32)

    loss = jax.block_until_ready(hydraulics_loss(x, P, imbalance))

    # Pure-JAX reference (same masked-mean math as torch.where-based indexing).
    mask_bool = psrc == 0
    ref = jnp.sum(jnp.square(imbalance[:, :, 0]) * mask_bool[None, :]) / (
        L * jnp.sum(mask_bool)
    )

    assert jnp.allclose(loss, ref, rtol=1e-6, atol=1e-6), (loss, ref)
    print("KERNEL_OK")
</pallas_src>

<mosaic_0001>
module attributes {stable_mosaic.version = 11 : i64} {
  func.func @_hydraulics_loss_kernel(%arg0: i32, %arg1: i32, %arg2: memref<8x128xf32, #tpu.memory_space<vmem>>, %arg3: memref<1x128xf32, #tpu.memory_space<vmem>>, %arg4: memref<1x8x128xf32, #tpu.memory_space<vmem>>, %arg5: memref<1x128xf32, #tpu.memory_space<vmem>>) attributes {dimension_semantics = [#tpu.dimension_semantics<parallel>, #tpu.dimension_semantics<arbitrary>], iteration_bounds = array<i64: 1, 1>, scalar_prefetch = 0 : i64, scratch_operands = 1 : i64, tpu.core_type = #tpu.core_type<tc>, window_params = [{transform_indices = @transform_0, window_bounds = array<i64: 8, 128>}, {transform_indices = @transform_1, window_bounds = array<i64: 1, 128>}, {transform_indices = @transform_2, window_bounds = array<i64: 1, 8, 128>}]} {
    %c0_i32 = arith.constant 0 : i32
    %0 = arith.cmpi eq, %arg1, %c0_i32 : i32
    %1 = arith.extui %0 : i1 to i32
    %c0_i32_0 = arith.constant 0 : i32
    %2 = arith.cmpi ne, %1, %c0_i32_0 : i32
    scf.if %2 {
      %cst_12 = arith.constant 0.000000e+00 : f32
      %27 = vector.broadcast %cst_12 : f32 to vector<1x128xf32>
      %c0_13 = arith.constant 0 : index
      %c0_14 = arith.constant 0 : index
      %28 = vector.load %arg5[%c0_13, %c0_14] : memref<1x128xf32, #tpu.memory_space<vmem>>, vector<1x128xf32>
      tpu.vector_store %arg5[%c0_13, %c0_14], %27 {strides = array<i32>} : memref<1x128xf32, #tpu.memory_space<vmem>>, vector<1x128xf32>,
    } else {
    }
    %c0 = arith.constant 0 : index
    %c0_1 = arith.constant 0 : index
    %3 = vector.load %arg2[%c0, %c0_1] : memref<8x128xf32, #tpu.memory_space<vmem>>, vector<8x128xf32>
    %4 = arith.mulf %3, %3 : vector<8x128xf32>
    %c0_2 = arith.constant 0 : index
    %c0_3 = arith.constant 0 : index
    %5 = vector.load %arg3[%c0_2, %c0_3] : memref<1x128xf32, #tpu.memory_space<vmem>>, vector<1x128xf32>
    %cst = arith.constant 0.000000e+00 : f32
    %6 = vector.broadcast %cst : f32 to vector<1x128xf32>
    %7 = arith.cmpf one, %5, %6 : vector<1x128xf32>
    %c8_i32 = arith.constant 8 : i32
    %8 = arith.muli %arg0, %c8_i32 : i32
    %9 = tpu.iota {dimensions = array<i32: 0>} : vector<8x1xi32>
    %10 = vector.broadcast %8 : i32 to vector<8x1xi32>
    %11 = arith.addi %10, %9 : vector<8x1xi32>
    %c3_i32 = arith.constant 3 : i32
    %12 = vector.broadcast %c3_i32 : i32 to vector<8x1xi32>
    %13 = arith.cmpi slt, %11, %12 : vector<8x1xi32>
    %14 = vector.broadcast %7 : vector<1x128xi1> to vector<8x128xi1>
    %15 = vector.broadcast %13 : vector<8x1xi1> to vector<8x128xi1>
    %16 = arith.andi %14, %15 : vector<8x128xi1>
    %cst_4 = arith.constant 0.000000e+00 : f32
    %17 = vector.broadcast %cst_4 : f32 to vector<8x128xf32>
    %18 = arith.select %16, %4, %17 : vector<8x128xi1>, vector<8x128xf32>
    %c0_5 = arith.constant 0 : index
    %c0_6 = arith.constant 0 : index
    %19 = vector.load %arg5[%c0_5, %c0_6] : memref<1x128xf32, #tpu.memory_space<vmem>>, vector<1x128xf32>
    %cst_7 = arith.constant dense<0.000000e+00> : vector<128xf32>
    %20 = vector.multi_reduction <add>, %18, %cst_7 [0] : vector<8x128xf32> to vector<128xf32>
    %21 = vector.shape_cast %20 : vector<128xf32> to vector<1x128xf32>
    %22 = arith.addf %19, %21 : vector<1x128xf32>
    %c0_8 = arith.constant 0 : index
    %c0_9 = arith.constant 0 : index
    %23 = vector.load %arg5[%c0_8, %c0_9] : memref<1x128xf32, #tpu.memory_space<vmem>>, vector<1x128xf32>
    tpu.vector_store %arg5[%c0_8, %c0_9], %22 {strides = array<i32>} : memref<1x128xf32, #tpu.memory_space<vmem>>, vector<1x128xf32>,
    %c0_i32_10 = arith.constant 0 : i32
    %24 = arith.cmpi eq, %arg1, %c0_i32_10 : i32
    %25 = arith.extui %24 : i1 to i32
    %c0_i32_11 = arith.constant 0 : i32
    %26 = arith.cmpi ne, %25, %c0_i32_11 : i32
    scf.if %26 {
      %c0_12 = arith.constant 0 : index
      %c0_13 = arith.constant 0 : index
      %27 = vector.load %arg5[%c0_12, %c0_13] : memref<1x128xf32, #tpu.memory_space<vmem>>, vector<1x128xf32>
      %28 = vector.shape_cast %27 : vector<1x128xf32> to vector<1x1x128xf32>
      %cst_14 = arith.constant dense<0.000000e+00> : vector<1xf32>
      %29 = vector.multi_reduction <add>, %28, %cst_14 [1, 2] : vector<1x1x128xf32> to vector<1xf32>
      %30 = vector.shape_cast %29 : vector<1xf32> to vector<1x1x1xf32>
      %31 = vector.extract %30[0, 0, 0] : f32 from vector<1x1x1xf32>
      %32 = vector.broadcast %31 : f32 to vector<1x8x128xf32>
      %c0_15 = arith.constant 0 : index
      %c0_16 = arith.constant 0 : index
      %c0_17 = arith.constant 0 : index
      %33 = vector.load %arg4[%c0_15, %c0_16, %c0_17] : memref<1x8x128xf32, #tpu.memory_space<vmem>>, vector<1x8x128xf32>
      tpu.vector_store %arg4[%c0_15, %c0_16, %c0_17], %32 {strides = array<i32>} : memref<1x8x128xf32, #tpu.memory_space<vmem>>, vector<1x8x128xf32>,
    } else {
    }
    return
  }
  func.func @transform_0(%arg0: i32, %arg1: i32) -> (i32, i32) {
    %c0_i32 = arith.constant 0 : i32
    return %arg0, %arg1 : i32, i32
  }
  func.func @transform_1(%arg0: i32, %arg1: i32) -> (i32, i32) {
    %c0_i32 = arith.constant 0 : i32
    %c0_i32_0 = arith.constant 0 : i32
    return %c0_i32, %arg1 : i32, i32
  }
  func.func @transform_2(%arg0: i32, %arg1: i32) -> (i32, i32, i32) {
    %c0_i32 = arith.constant 0 : i32
    %c0_i32_0 = arith.constant 0 : i32
    %c0_i32_1 = arith.constant 0 : i32
    return %arg0, %c0_i32, %c0_i32_0 : i32, i32, i32
  }
}

</mosaic_0001>

<llo_original>
// kernel: tpu_custom_call.1
$region0: #{tpu_custom_call.1}
  #allocation0 [shape = 'u32[]', space=smem, size = 0x4, offset = 0x4, fixed_abs, tag = 'smem constant byte address 0x4 - core index']
  #allocation1 [shape = 'u32[72,128]{1,0:T(1,128)}', space=vmem, size = 0x9000, scoped, tag = 'internal scratch']
  #allocation2 [shape = 'f32[1,128]{1,0:T(1,128)}', space=vmem, size = 0x200, scoped, tag = 'scratch operand']
  %s0 = inlined_call_operand.hbm [shape: f32[3,16], index: 0, kind: input, shape index: {}]
  %s1 = inlined_call_operand.hbm [shape: f32[1,128], index: 1, kind: input, shape index: {}]
  %s2 = inlined_call_operand.hbm [shape: f32[1,8,128], index: 2, kind: output, shape index: {}]
  %s3 = sld [smem:[#allocation0]]
  $region34: #{tpu_custom_call.1} parent=0
    _
  %s5 = ssub.s32 1, %s3
  %s6 = scalar_select 0, %s5, %s3
  $region1: #{tpu_custom_call.1} parent=0
    #allocation3 [shape = 'u8[4096]{0}', space=vmem, size = 0x1000, scoped, tag = 'input window, operand 0, single buffered']
    #allocation4 [shape = 's32[1]{0}', space=sflag, size = 0x4, scoped, tag = 'scoped memory for tpu_custom_call.1']
    #allocation5 [shape = 's32[1]{0}', space=sflag, size = 0x4, scoped, tag = 'scoped memory for tpu_custom_call.1']
    #allocation6 [shape = 'u8[512]{0}', space=vmem, size = 0x400, scoped, tag = 'input window, operand 1, single buffered']
    #allocation7 [shape = 's32[1]{0}', space=sflag, size = 0x4, scoped, tag = 'scoped memory for tpu_custom_call.1']
    #allocation8 [shape = 'u8[4096]{0}', space=vmem, size = 0x1000, scoped, tag = 'output window, operand 0, single buffered']
    %7 = vsyncpa [#allocation4], 0
    %8 = vsyncpa [#allocation7], 0
    %9 = vsyncpa [#allocation5], 0
    // Predicated region
    $region2: #{tpu_custom_call.1} parent=1 // pred_check
      _
    $region3: #{tpu_custom_call.1} parent=1 // pred_check_branch
      %11 = sbr.rel (0) target = $region5
    $region4: #{tpu_custom_call.1} parent=1 // pred_region
      %13 = vsyncadd [#allocation4], 64
      %s14 = sshll.u32 %s0, 4
      %s15 = int_to_ptr.hbm [resolvable:$true] %s14
      %s16 = sshll.u32 [#allocation3], 4
      %s17 = int_to_ptr.vmem [resolvable:$true] %s16
      %22 = dma.hbm_to_vmem [thread:$0]  %s15, 64, %s17, [#allocation4], 64, 64, 4
    $region5: #{tpu_custom_call.1} parent=1 // pred_fallthru
      _
    // Predicated region
    $region6: #{tpu_custom_call.1} parent=1 // pred_check
      _
    $region7: #{tpu_custom_call.1} parent=1 // pred_check_branch
      %24 = sbr.rel (0) target = $region9
    $region8: #{tpu_custom_call.1} parent=1 // pred_region
      %26 = vsyncadd [#allocation7], 0
      %s28 = sshll.u32 %s1, 4
      %s29 = int_to_ptr.hbm [resolvable:$true] %s28
      %s30 = sshll.u32 [#allocation6], 4
      %s31 = int_to_ptr.vmem [resolvable:$true] %s30
      %33 = dma.hbm_to_vmem [thread:$0]  %s29, 16, %s31, [#allocation7]
    $region9: #{tpu_custom_call.1} parent=1 // pred_fallthru
      _
    // Predicated region
    $region10: #{tpu_custom_call.1} parent=1 // pred_check
      _
    $region11: #{tpu_custom_call.1} parent=1 // pred_check_branch
      %35 = sbr.rel (0) target = $region13
    $region12: #{tpu_custom_call.1} parent=1 // pred_region
      %37 = dma.done [#allocation4], 128
    $region13: #{tpu_custom_call.1} parent=1 // pred_fallthru
      _
    // Predicated region
    $region14: #{tpu_custom_call.1} parent=1 // pred_check
      _
    $region15: #{tpu_custom_call.1} parent=1 // pred_check_branch
      %39 = sbr.rel (0) target = $region17
    $region16: #{tpu_custom_call.1} parent=1 // pred_region
      %41 = dma.done [#allocation7], 16
    $region17: #{tpu_custom_call.1} parent=1 // pred_fallthru
      _
    %p42 = scmp.eq.s32.totalorder 0, 0
    // Predicated region
    $region18: #{tpu_custom_call.1} parent=1 // pred_check
      %p43 = pneg %p42
    $region19: #{tpu_custom_call.1} parent=1 // pred_check_branch
      %45 = sbr.rel (%p43) target = $region21
    $region20: #{tpu_custom_call.1} parent=1 // pred_region
      %46 = vst [vmem:[#allocation2] sm:$0x1] 0.0
    $region21: #{tpu_custom_call.1} parent=1 // pred_fallthru
      _
    %v47 = vld [vmem:[#allocation3] sm:$0xff]
    %v48 = vmul.f32 %v47, %v47
    %v49 = vld [vmem:[#allocation6] sm:$0x1]
    %vm50 = vcmp.ne.f32.partialorder %v49, 0.0
    %s51 = smul.u32 0, 8
    %v52 = vlaneseq
    %v53 = vshrl.u32 %v52, 7
    %v54 = vstv %s51
    %v55 = vadd.s32 %v54, %v53
    %vm56 = vcmp.lt.s32.totalorder %v55, 3
    %v57 = vsel %vm50, 1, 0
    %v58 = vperm.slane %v57, 0
    %vm59 = vcmp.eq.s32.totalorder %v58, 1
    %v60 = vsel %vm56, 1, 0
    %vm61 = vcmp.eq.s32.totalorder %v60, 1
    %vm62 = vmand %vm59, %vm61
    %v63 = vsel %vm62, %v48, 0.0
    %v64 = vld [vmem:[#allocation2] sm:$0x1]
    %v65 = vrot.slane %v63, 4
    %v66 = vadd.f32 %v63, %v65
    %v67 = vrot.slane %v66, 2
    %v68 = vadd.f32 %v66, %v67
    %v69 = vrot.slane %v68, 1
    %v70 = vadd.f32 %v68, %v69
    %v71 = vadd.f32 %v64, %v70
    %72 = vst [vmem:[#allocation2] sm:$0x1] %v71
    // Predicated region
    $region22: #{tpu_custom_call.1} parent=1 // pred_check
      %p73 = pneg %p42
    $region23: #{tpu_custom_call.1} parent=1 // pred_check_branch
      %75 = sbr.rel (%p73) target = $region25
    $region24: #{tpu_custom_call.1} parent=1 // pred_region
      %v76 = vld [vmem:[#allocation2] sm:$0x1]
      %vm77 = vcmask 1040384
      %v78 = vsel %vm77, %v76, 0.0
      %79 = vadd.xlane.f32.xlu0 %v78
      %v80 = vpop.xlane.xlu0 %79
      %v81 = vrot.slane %v80, 4
      %v82 = vadd.f32 %v80, %v81
      %v83 = vrot.slane %v82, 2
      %v84 = vadd.f32 %v82, %v83
      %v85 = vrot.slane %v84, 1
      %v86 = vadd.f32 %v84, %v85
      %s87 = vtos %v86
      %v88 = vstv %s87
      %89 = vst [vmem:[#allocation8] sm:$0xff] %v88
    $region25: #{tpu_custom_call.1} parent=1 // pred_fallthru
      _
    // Predicated region
    $region26: #{tpu_custom_call.1} parent=1 // pred_check
      _
    $region27: #{tpu_custom_call.1} parent=1 // pred_check_branch
      %91 = sbr.rel (0) target = $region29
    $region28: #{tpu_custom_call.1} parent=1 // pred_region
      %93 = vsyncadd [#allocation5], 0
      %s95 = sshll.u32 [#allocation8], 4
      %s96 = int_to_ptr.vmem [resolvable:$true] %s95
      %s97 = sshll.u32 %s2, 4
      %s98 = int_to_ptr.hbm [resolvable:$true] %s97
      %100 = dma.vmem_to_hbm [thread:$0]  %s96, 128, %s98, [#allocation5]
    $region29: #{tpu_custom_call.1} parent=1 // pred_fallthru
      _
    // Predicated region
    $region30: #{tpu_custom_call.1} parent=1 // pred_check
      _
    $region31: #{tpu_custom_call.1} parent=1 // pred_check_branch
      %102 = sbr.rel (0) target = $region33
    $region32: #{tpu_custom_call.1} parent=1 // pred_region
      %104 = dma.done [#allocation5], 128
    $region33: #{tpu_custom_call.1} parent=1 // pred_fallthru
      _
    %105 = vsyncpa [#allocation4], 1
    %106 = vsyncpa [#allocation7], 1
    %107 = vsyncpa [#allocation5], 1

</llo_original>
